<compile_context>
chip_gen: v7x
topology: tpu7x:2x2x1
jax: 0.10.0
libtpu: 0.0.40
codegen_flags: <defaults>
</compile_context>

<pallas_src>
import functools

import jax
import jax.numpy as jnp
from jax.experimental import pallas as pl
from jax.experimental.pallas import tpu as pltpu

_HALO = 128  # right-halo width in lanes; must cover T - 1


def _round_up(v, m):
    return (v + m - 1) // m * m


def _tile_rows(rows, itemsize):
    # sublane rows after native tiling: 8 for f32, 16 for bf16
    return _round_up(rows, (32 // (itemsize * 8)) * 8)


def _temporal_conv_kernel(x_ref, h_ref, w_ref, b_ref, o_ref, *, T, TL, c_out):
    # x_ref: (C_in, TL)            main input window (compute dtype)
    # h_ref: (C_in, HALO)          right halo (compute dtype)
    # w_ref: (T, c_out_pad, C_in)  tap-aligned fused weights, resident in VMEM
    # b_ref: (c_out, 1)            fp32 bias (zeros when bias=False), resident
    # o_ref: (c_out, TL)           fp32 output tile
    xw = jnp.concatenate([x_ref[...], h_ref[...]], axis=-1)      # (C_in, TL + HALO)
    acc = jnp.dot(w_ref[0], xw[:, 0:TL], preferred_element_type=jnp.float32)
    for j in range(1, T):                                        # static unroll over taps
        acc = acc + jnp.dot(w_ref[j], xw[:, j:j + TL],
                            preferred_element_type=jnp.float32)
    o_ref[...] = acc[:c_out, :] + b_ref[...]


def _prepare_params(in_channels, kernels, weights, biases, compute_dtype):
    """Fuse all conv groups into one tap-aligned weight tensor (hoisted out of the hot path)."""
    counts = list(kernels.values())
    c_out = sum(counts)
    lefts = [(k - 1) // 2 for k in kernels]            # PyTorch 'same': left = (k-1)//2
    rights = [k - 1 - lf for k, lf in zip(kernels, lefts)]
    pad_left, pad_right = max(lefts), max(rights)
    T = pad_left + pad_right + 1

    c_out_pad = _round_up(c_out, 16)                   # keep matmul M-dim tile aligned
    w_taps = jnp.zeros((T, c_out_pad, in_channels), jnp.float32)
    row = 0
    for (k, cnt), w, lf in zip(kernels.items(), weights, lefts):
        off = pad_left - lf                            # tap offset reproducing per-group 'same' pad
        # w: (cnt, C_in, k) -> (k, cnt, C_in)
        w_taps = w_taps.at[off:off + k, row:row + cnt, :].set(jnp.transpose(w, (2, 0, 1)))
        row += cnt

    b = jnp.zeros((c_out, 1), jnp.float32)
    if biases is not None:
        b = jnp.concatenate([jnp.reshape(jnp.asarray(bi), (-1,)) for bi in biases])
        b = b.reshape(c_out, 1).astype(jnp.float32)
    return w_taps.astype(compute_dtype), b, T, pad_left, c_out


def _vmem_bytes(C_in, c_out, T, TL, itemsize):
    # rough estimate: double-buffered pipeline blocks + resident weights/bias + temporaries
    c_in_r = _tile_rows(C_in, itemsize)
    c_out_r = _tile_rows(c_out, 4)
    c_out_pad = _round_up(c_out, 16)
    in_blk = 2 * c_in_r * (TL + _HALO) * itemsize
    out_blk = 2 * c_out_r * TL * 4
    resident = 2 * (T * c_out_pad * c_in_r * itemsize + c_out_r * 4)
    temps = 2 * c_in_r * (TL + _HALO) * itemsize + 2 * c_out_pad * TL * 4
    return in_blk + out_blk + resident + temps


def _choose_lane_tile(N, L, C_in, c_out, T, itemsize, *, target, vmem_budget=12 << 20):
    TL = min(target, _round_up(L, 128))
    # v7x has 2 TensorCores: keep at least 2 parallel grid steps when the problem allows.
    if N * (-(-L // TL)) < 2 and L > 128:
        TL = _round_up(-(-L // 2), 128)
    # conservative VMEM budget: under v5e's 16 MiB scoped VMEM and v7x's 64 MiB physical.
    while TL > 128 and _vmem_bytes(C_in, c_out, T, TL, itemsize) > vmem_budget:
        TL = max(128, _round_up(TL // 2, 128))
    return TL


def temporal_layer_forward(x, w_taps, b, T, pad_left, *, compute_dtype=jnp.bfloat16,
                           lane_tile_target=32768):
    """Pallas equivalent of TemporalLayer.forward.

    Args:
      x:        (N, C_in, L)
      w_taps:   (T, c_out_pad, C_in) fused tap-aligned weights (compute_dtype)
      b:        (c_out, 1) fp32 bias (zeros for bias=False)
      T:        number of fused taps (= max_left_pad + max_right_pad + 1)
      pad_left: common left 'same' padding (= max over groups of (k-1)//2)
    Returns:
      (N, c_out, L) float32
    """
    N, C_in, L = x.shape
    T_w, c_out_pad, C_in_w = w_taps.shape
    c_out = b.shape[0]
    assert T_w == T and C_in_w == C_in
    assert T - 1 <= _HALO, "combined kernel support larger than the halo block"

    itemsize = jnp.dtype(compute_dtype).itemsize
    TL = _choose_lane_tile(N, L, C_in, c_out, T, itemsize, target=lane_tile_target)
    n_l = -(-L // TL)                      # ceil(L / TL); last tile is store-masked
    L_in = n_l * TL + _HALO                # every main/halo DMA block stays in bounds

    # Only per-call prep: cast to compute dtype BEFORE padding (halves the padded
    # intermediate), then a single zero-pad = left 'same' pad + right halo/zeros.
    x_in = jnp.pad(x.astype(compute_dtype),
                   ((0, 0), (0, 0), (pad_left, L_in - pad_left - L)))

    kernel = functools.partial(_temporal_conv_kernel, T=T, TL=TL, c_out=c_out)
    blocks_per_tile = TL // _HALO

    return pl.pallas_call(
        kernel,
        out_shape=jax.ShapeDtypeStruct((N, c_out, L), jnp.float32),
        grid=(N, n_l),
        in_specs=[
            # main window: x_in[n, :, i*TL : (i+1)*TL]
            pl.BlockSpec((None, C_in, TL), lambda n, i: (n, 0, i)),
            # right halo: x_in[n, :, (i+1)*TL : (i+1)*TL + HALO]
            pl.BlockSpec((None, C_in, _HALO),
                         lambda n, i: (n, 0, (i + 1) * blocks_per_tile)),
            # resident fused weights + bias (same block every step -> stays in VMEM)
            pl.BlockSpec((T, c_out_pad, C_in), lambda n, i: (0, 0, 0)),
            pl.BlockSpec((c_out, 1), lambda n, i: (0, 0)),
        ],
        out_specs=pl.BlockSpec((None, c_out, TL), lambda n, i: (n, 0, i)),
        compiler_params=pltpu.CompilerParams(
            dimension_semantics=("parallel", "parallel")),
    )(x_in, x_in, w_taps, b)


def make_temporal_layer(in_channels, kernels, weights, biases=None, *,
                        compute_dtype=jnp.bfloat16, lane_tile_target=32768):
    """Builds a jitted forward for TemporalLayer; weight fusion runs once here."""
    w_taps, b, T, pad_left, _ = _prepare_params(in_channels, kernels, weights, biases,
                                                compute_dtype)

    @jax.jit
    def forward(x):
        return temporal_layer_forward(x, w_taps, b, T, pad_left,
                                      compute_dtype=compute_dtype,
                                      lane_tile_target=lane_tile_target)

    return forward


def _reference_forward(x, weights, kernels, biases=None):
    """Pure-JAX reference matching PyTorch Conv1d(padding='same')."""
    outs = []
    bs = biases if biases is not None else [None] * len(kernels)
    for (k, _cnt), w, bi in zip(kernels.items(), weights, bs):
        lf = (k - 1) // 2
        rt = k - 1 - lf
        y = jax.lax.conv_general_dilated(
            x, w, window_strides=(1,), padding=[(lf, rt)],
            dimension_numbers=("NCH", "OIH", "NCH"),
            precision=jax.lax.Precision.HIGHEST)
        if bi is not None:
            y = y + jnp.reshape(bi, (1, -1, 1))
        outs.append(y)
    return jnp.concatenate(outs, axis=-2)  # concat along channel dim (dim=-2)


if __name__ == "__main__":
    # Module config: in_channels=4, kernels={3: 5, 5: 4, 8: 3} -> out_channels = 12
    in_channels = 4
    kernels = {3: 5, 5: 4, 8: 3}   # includes an even kernel (asymmetric 'same' pad)
    N, L = 2, 16

    key = jax.random.PRNGKey(0)
    kx, *kws = jax.random.split(key, 1 + len(kernels))
    x = jax.random.normal(kx, (N, in_channels, L), dtype=jnp.float32)
    weights = [
        jax.random.normal(kw, (cnt, in_channels, k), dtype=jnp.float32) * 0.1
        for kw, (k, cnt) in zip(kws, kernels.items())
    ]

    # Round operands through bf16 so the fp32 reference sees exactly the values the
    # (bf16-fed, fp32-accumulating) kernel consumes -> tight tolerance stays valid.
    x = x.astype(jnp.bfloat16).astype(jnp.float32)
    weights = [w.astype(jnp.bfloat16).astype(jnp.float32) for w in weights]

    forward = make_temporal_layer(in_channels, kernels, weights)   # bias=False (module default)
    y = jax.block_until_ready(forward(x))

    y_ref = _reference_forward(x, weights, kernels)
    assert y.shape == (N, sum(kernels.values()), L), y.shape
    err = float(jnp.max(jnp.abs(y - y_ref)))
    assert jnp.allclose(y, y_ref, atol=1e-4, rtol=1e-4), err

    print("KERNEL_OK")
</pallas_src>

<mosaic_0001>
module attributes {stable_mosaic.version = 11 : i64} {
  func.func @_temporal_conv_kernel(%arg0: i32, %arg1: i32, %arg2: memref<1x4x128xbf16, #tpu.memory_space<vmem>>, %arg3: memref<1x4x128xbf16, #tpu.memory_space<vmem>>, %arg4: memref<8x16x4xbf16, #tpu.memory_space<vmem>>, %arg5: memref<12x1xf32, #tpu.memory_space<vmem>>, %arg6: memref<1x12x128xf32, #tpu.memory_space<vmem>>) attributes {dimension_semantics = [#tpu.dimension_semantics<parallel>, #tpu.dimension_semantics<parallel>], iteration_bounds = array<i64: 2, 1>, scalar_prefetch = 0 : i64, scratch_operands = 0 : i64, tpu.core_type = #tpu.core_type<tc>, window_params = [{transform_indices = @transform_0, window_bounds = array<i64: 1, 4, 128>}, {transform_indices = @transform_1, window_bounds = array<i64: 1, 4, 128>}, {pipeline_mode = #tpu.pipeline_mode<synchronous>, transform_indices = @transform_2, window_bounds = array<i64: 8, 16, 4>}, {pipeline_mode = #tpu.pipeline_mode<synchronous>, transform_indices = @transform_3, window_bounds = array<i64: 12, 1>}, {transform_indices = @transform_4, window_bounds = array<i64: 1, 12, 128>}]} {
    %c0 = arith.constant 0 : index
    %c0_0 = arith.constant 0 : index
    %c0_1 = arith.constant 0 : index
    %0 = vector.load %arg2[%c0, %c0_0, %c0_1] : memref<1x4x128xbf16, #tpu.memory_space<vmem>>, vector<1x4x128xbf16>
    %1 = vector.shape_cast %0 : vector<1x4x128xbf16> to vector<4x128xbf16>
    %c0_2 = arith.constant 0 : index
    %c0_3 = arith.constant 0 : index
    %c0_4 = arith.constant 0 : index
    %2 = vector.load %arg3[%c0_2, %c0_3, %c0_4] : memref<1x4x128xbf16, #tpu.memory_space<vmem>>, vector<1x4x128xbf16>
    %3 = vector.shape_cast %2 : vector<1x4x128xbf16> to vector<4x128xbf16>
    %4 = tpu.concatenate %1, %3 in 1 : vector<4x128xbf16>, vector<4x128xbf16> -> vector<4x256xbf16>
    %c0_5 = arith.constant 0 : index
    %c0_6 = arith.constant 0 : index
    %c0_7 = arith.constant 0 : index
    %5 = vector.load %arg4[%c0_5, %c0_6, %c0_7] : memref<8x16x4xbf16, #tpu.memory_space<vmem>>, vector<1x16x4xbf16>
    %6 = vector.shape_cast %5 : vector<1x16x4xbf16> to vector<16x4xbf16>
    %7 = vector.extract_strided_slice %4 {offsets = [0, 0], sizes = [4, 128], strides = [1, 1]} : vector<4x256xbf16> to vector<4x128xbf16>
    %cst = arith.constant dense<0.000000e+00> : vector<16x128xf32>
    %8 = tpu.matmul %6, %7, %cst {dimension_numbers = #tpu.dot_dimension_numbers<[1], [0], [0], [1], [0, 0, 1, 1], [], []>} : vector<16x4xbf16>, vector<4x128xbf16>, vector<16x128xf32> -> vector<16x128xf32>
    %c1 = arith.constant 1 : index
    %c0_8 = arith.constant 0 : index
    %c0_9 = arith.constant 0 : index
    %9 = vector.load %arg4[%c1, %c0_8, %c0_9] : memref<8x16x4xbf16, #tpu.memory_space<vmem>>, vector<1x16x4xbf16>
    %10 = vector.shape_cast %9 : vector<1x16x4xbf16> to vector<16x4xbf16>
    %11 = vector.extract_strided_slice %4 {offsets = [0, 1], sizes = [4, 128], strides = [1, 1]} : vector<4x256xbf16> to vector<4x128xbf16>
    %cst_10 = arith.constant dense<0.000000e+00> : vector<16x128xf32>
    %12 = tpu.matmul %10, %11, %cst_10 {dimension_numbers = #tpu.dot_dimension_numbers<[1], [0], [0], [1], [0, 0, 1, 1], [], []>} : vector<16x4xbf16>, vector<4x128xbf16>, vector<16x128xf32> -> vector<16x128xf32>
    %13 = arith.addf %8, %12 : vector<16x128xf32>
    %c2 = arith.constant 2 : index
    %c0_11 = arith.constant 0 : index
    %c0_12 = arith.constant 0 : index
    %14 = vector.load %arg4[%c2, %c0_11, %c0_12] : memref<8x16x4xbf16, #tpu.memory_space<vmem>>, vector<1x16x4xbf16>
    %15 = vector.shape_cast %14 : vector<1x16x4xbf16> to vector<16x4xbf16>
    %16 = vector.extract_strided_slice %4 {offsets = [0, 2], sizes = [4, 128], strides = [1, 1]} : vector<4x256xbf16> to vector<4x128xbf16>
    %cst_13 = arith.constant dense<0.000000e+00> : vector<16x128xf32>
    %17 = tpu.matmul %15, %16, %cst_13 {dimension_numbers = #tpu.dot_dimension_numbers<[1], [0], [0], [1], [0, 0, 1, 1], [], []>} : vector<16x4xbf16>, vector<4x128xbf16>, vector<16x128xf32> -> vector<16x128xf32>
    %18 = arith.addf %13, %17 : vector<16x128xf32>
    %c3 = arith.constant 3 : index
    %c0_14 = arith.constant 0 : index
    %c0_15 = arith.constant 0 : index
    %19 = vector.load %arg4[%c3, %c0_14, %c0_15] : memref<8x16x4xbf16, #tpu.memory_space<vmem>>, vector<1x16x4xbf16>
    %20 = vector.shape_cast %19 : vector<1x16x4xbf16> to vector<16x4xbf16>
    %21 = vector.extract_strided_slice %4 {offsets = [0, 3], sizes = [4, 128], strides = [1, 1]} : vector<4x256xbf16> to vector<4x128xbf16>
    %cst_16 = arith.constant dense<0.000000e+00> : vector<16x128xf32>
    %22 = tpu.matmul %20, %21, %cst_16 {dimension_numbers = #tpu.dot_dimension_numbers<[1], [0], [0], [1], [0, 0, 1, 1], [], []>} : vector<16x4xbf16>, vector<4x128xbf16>, vector<16x128xf32> -> vector<16x128xf32>
    %23 = arith.addf %18, %22 : vector<16x128xf32>
    %c4 = arith.constant 4 : index
    %c0_17 = arith.constant 0 : index
    %c0_18 = arith.constant 0 : index
    %24 = vector.load %arg4[%c4, %c0_17, %c0_18] : memref<8x16x4xbf16, #tpu.memory_space<vmem>>, vector<1x16x4xbf16>
    %25 = vector.shape_cast %24 : vector<1x16x4xbf16> to vector<16x4xbf16>
    %26 = vector.extract_strided_slice %4 {offsets = [0, 4], sizes = [4, 128], strides = [1, 1]} : vector<4x256xbf16> to vector<4x128xbf16>
    %cst_19 = arith.constant dense<0.000000e+00> : vector<16x128xf32>
    %27 = tpu.matmul %25, %26, %cst_19 {dimension_numbers = #tpu.dot_dimension_numbers<[1], [0], [0], [1], [0, 0, 1, 1], [], []>} : vector<16x4xbf16>, vector<4x128xbf16>, vector<16x128xf32> -> vector<16x128xf32>
    %28 = arith.addf %23, %27 : vector<16x128xf32>
    %c5 = arith.constant 5 : index
    %c0_20 = arith.constant 0 : index
    %c0_21 = arith.constant 0 : index
    %29 = vector.load %arg4[%c5, %c0_20, %c0_21] : memref<8x16x4xbf16, #tpu.memory_space<vmem>>, vector<1x16x4xbf16>
    %30 = vector.shape_cast %29 : vector<1x16x4xbf16> to vector<16x4xbf16>
    %31 = vector.extract_strided_slice %4 {offsets = [0, 5], sizes = [4, 128], strides = [1, 1]} : vector<4x256xbf16> to vector<4x128xbf16>
    %cst_22 = arith.constant dense<0.000000e+00> : vector<16x128xf32>
    %32 = tpu.matmul %30, %31, %cst_22 {dimension_numbers = #tpu.dot_dimension_numbers<[1], [0], [0], [1], [0, 0, 1, 1], [], []>} : vector<16x4xbf16>, vector<4x128xbf16>, vector<16x128xf32> -> vector<16x128xf32>
    %33 = arith.addf %28, %32 : vector<16x128xf32>
    %c6 = arith.constant 6 : index
    %c0_23 = arith.constant 0 : index
    %c0_24 = arith.constant 0 : index
    %34 = vector.load %arg4[%c6, %c0_23, %c0_24] : memref<8x16x4xbf16, #tpu.memory_space<vmem>>, vector<1x16x4xbf16>
    %35 = vector.shape_cast %34 : vector<1x16x4xbf16> to vector<16x4xbf16>
    %36 = vector.extract_strided_slice %4 {offsets = [0, 6], sizes = [4, 128], strides = [1, 1]} : vector<4x256xbf16> to vector<4x128xbf16>
    %cst_25 = arith.constant dense<0.000000e+00> : vector<16x128xf32>
    %37 = tpu.matmul %35, %36, %cst_25 {dimension_numbers = #tpu.dot_dimension_numbers<[1], [0], [0], [1], [0, 0, 1, 1], [], []>} : vector<16x4xbf16>, vector<4x128xbf16>, vector<16x128xf32> -> vector<16x128xf32>
    %38 = arith.addf %33, %37 : vector<16x128xf32>
    %c7 = arith.constant 7 : index
    %c0_26 = arith.constant 0 : index
    %c0_27 = arith.constant 0 : index
    %39 = vector.load %arg4[%c7, %c0_26, %c0_27] : memref<8x16x4xbf16, #tpu.memory_space<vmem>>, vector<1x16x4xbf16>
    %40 = vector.shape_cast %39 : vector<1x16x4xbf16> to vector<16x4xbf16>
    %41 = vector.extract_strided_slice %4 {offsets = [0, 7], sizes = [4, 128], strides = [1, 1]} : vector<4x256xbf16> to vector<4x128xbf16>
    %cst_28 = arith.constant dense<0.000000e+00> : vector<16x128xf32>
    %42 = tpu.matmul %40, %41, %cst_28 {dimension_numbers = #tpu.dot_dimension_numbers<[1], [0], [0], [1], [0, 0, 1, 1], [], []>} : vector<16x4xbf16>, vector<4x128xbf16>, vector<16x128xf32> -> vector<16x128xf32>
    %43 = arith.addf %38, %42 : vector<16x128xf32>
    %44 = vector.extract_strided_slice %43 {offsets = [0, 0], sizes = [12, 128], strides = [1, 1]} : vector<16x128xf32> to vector<12x128xf32>
    %c0_29 = arith.constant 0 : index
    %c0_30 = arith.constant 0 : index
    %45 = vector.load %arg5[%c0_29, %c0_30] : memref<12x1xf32, #tpu.memory_space<vmem>>, vector<12x1xf32>
    %46 = vector.broadcast %45 : vector<12x1xf32> to vector<12x128xf32>
    %47 = arith.addf %44, %46 : vector<12x128xf32>
    %c0_31 = arith.constant 0 : index
    %c0_32 = arith.constant 0 : index
    %c0_33 = arith.constant 0 : index
    %48 = vector.load %arg6[%c0_31, %c0_32, %c0_33] : memref<1x12x128xf32, #tpu.memory_space<vmem>>, vector<1x12x128xf32>
    %49 = vector.shape_cast %48 : vector<1x12x128xf32> to vector<12x128xf32>
    %50 = vector.shape_cast %47 : vector<12x128xf32> to vector<1x12x128xf32>
    tpu.vector_store %arg6[%c0_31, %c0_32, %c0_33], %50 {strides = array<i32>} : memref<1x12x128xf32, #tpu.memory_space<vmem>>, vector<1x12x128xf32>,
    return
  }
  func.func @transform_0(%arg0: i32, %arg1: i32) -> (i32, i32, i32) {
    %c0_i32 = arith.constant 0 : i32
    %c0_i32_0 = arith.constant 0 : i32
    return %arg0, %c0_i32, %arg1 : i32, i32, i32
  }
  func.func @transform_1(%arg0: i32, %arg1: i32) -> (i32, i32, i32) {
    %c1_i32 = arith.constant 1 : i32
    %0 = arith.addi %arg1, %c1_i32 : i32
    %c1_i32_0 = arith.constant 1 : i32
    %1 = arith.muli %0, %c1_i32_0 : i32
    %c0_i32 = arith.constant 0 : i32
    %c0_i32_1 = arith.constant 0 : i32
    return %arg0, %c0_i32, %1 : i32, i32, i32
  }
  func.func @transform_2(%arg0: i32, %arg1: i32) -> (i32, i32, i32) {
    %c0_i32 = arith.constant 0 : i32
    %c0_i32_0 = arith.constant 0 : i32
    %c0_i32_1 = arith.constant 0 : i32
    %c0_i32_2 = arith.constant 0 : i32
    return %c0_i32, %c0_i32_0, %c0_i32_1 : i32, i32, i32
  }
  func.func @transform_3(%arg0: i32, %arg1: i32) -> (i32, i32) {
    %c0_i32 = arith.constant 0 : i32
    %c0_i32_0 = arith.constant 0 : i32
    %c0_i32_1 = arith.constant 0 : i32
    return %c0_i32, %c0_i32_0 : i32, i32
  }
  func.func @transform_4(%arg0: i32, %arg1: i32) -> (i32, i32, i32) {
    %c0_i32 = arith.constant 0 : i32
    %c0_i32_0 = arith.constant 0 : i32
    return %arg0, %c0_i32, %arg1 : i32, i32, i32
  }
}

</mosaic_0001>

<llo_original>
// kernel: forward.1
$region0: #{forward.1}
  #allocation0 [shape = 'u32[]', space=smem, size = 0x4, offset = 0x4, fixed_abs, tag = 'smem constant byte address 0x4 - core index']
  #allocation1 [shape = 'u32[144,128]{1,0:T(1,128)}', space=vmem, size = 0x12000, scoped, tag = 'internal scratch']
  %s0 = inlined_call_operand.vmem [shape: bf16[2,4,256], index: 0, kind: input, shape index: {}, may-alias: {0,1}]
  %s1 = inlined_call_operand.vmem [shape: bf16[2,4,256], index: 1, kind: input, shape index: {}, may-alias: {0,1}]
  %s2 = inlined_call_operand.hbm [shape: bf16[8,16,4], index: 2, kind: input, shape index: {}]
  %s3 = inlined_call_operand.vmem [shape: f32[12,1], index: 3, kind: input, shape index: {}]
  %s4 = inlined_call_operand.vmem [shape: f32[2,12,16], index: 4, kind: output, shape index: {}]
  %s5 = sld [smem:[#allocation0]]
  $region53: #{forward.1} parent=0
    _
  %s7 = ssub.s32 1, %s5
  %s8 = scalar_select 0, %s7, %s5
  $region1: #{forward.1} parent=0
    #allocation2 [shape = 'u8[32768]{0}', space=vmem, size = 0x8000, scoped, tag = 'input window, operand 2, single buffered']
    #allocation3 [shape = 's32[2]{0}', space=sflag, size = 0x8, scoped, tag = 'scoped memory for forward.1']
    %9 = vsyncpa [#allocation3], 0
    loop: start=0, step=1, limit=4
    $region2: #{forward.1} parent=1 // loop_pre_header
      _
    $region3: #{forward.1} parent=1 // loop_header
      %s11 = sphi 0, %s15
      %p12 = scmp.ge.s32.totalorder %s11, 4
      %s18 = sphi 0, %s30
      %s19 = sphi 0, %s26
      %s20 = sphi 0, %s18
      %s21 = sphi 0, %s19
      %s22 = sphi 0, %s20
      %s23 = sphi 0, %s21
      %s35 = sphi 0, %s37
      %s38 = sphi 0, %s35
      %s39 = sphi 0, %s38
      %s55 = sphi 0, %s39
      %s65 = sphi 0, %s67
      %s68 = sphi 0, %s65
      %s69 = sphi 0, %s68
      %s85 = sphi 0, %s69
      %s89 = sphi 0, %s89
      %s91 = sphi 0, %s89
      %s92 = sphi 0, %s91
      %s106 = sphi 0, %s92
      %s110 = sphi 0, %s110
      %s112 = sphi 0, %s110
      %s113 = sphi 0, %s112
      %s127 = sphi 0, %s113
      %s135 = sphi 0, %s137
      %s138 = sphi 0, %s135
      %s139 = sphi 0, %s138
      %s155 = sphi 0, %s139
    $region4: #{forward.1} parent=1 // loop_header_branch
      %14 = sbr.rel (%p12) target = $region8
    $region5: #{forward.1} parent=1 // loop_body
      %s16 = ssub.s32 %s11, 1
      %s17 = ssub.s32 %s11, 2
      %s24 = sadd.s32 1, %s19
      %p25 = scmp.ge.s32.totalorder %s24, 1
      %s26 = scalar_select %p25, 0, %s24
      %s27 = sadd.s32 1, %s18
      %s28 = scalar_select %p25, %s27, %s18
      %p29 = scmp.ge.s32.totalorder %s28, 2
      %s30 = scalar_select %p29, 0, %s28
      %s31 = ssub.s32 %s18, %s30
      %s32 = ssub.s32 %s19, %s26
      %s33 = sor.u32 %s31, %s32
      %p34 = scmp.eq.s32.totalorder %s33, 0
      %s36 = sadd.s32 %s35, 1
      %s37 = scalar_select %p34, %s35, %s36
      %p40 = pneg %p34
      %p41 = scmp.eq.s32.totalorder %s11, 1
      %p42 = por %p40, %p41
      %p43 = scmp.ne.s32.totalorder %s35, %s38
      %p44 = scmp.eq.s32.totalorder %s11, 0
      %p45 = por %p43, %p44
      %p46 = scmp.ne.s32.totalorder %s35, %s38
      %p47 = scmp.eq.s32.totalorder %s16, 1
      %p48 = por %p46, %p47
      %p49 = scmp.ne.s32.totalorder %s38, %s39
      %p50 = scmp.eq.s32.totalorder %s16, 0
      %p51 = por %p49, %p50
      %p52 = scmp.ne.s32.totalorder %s38, %s39
      %p53 = scmp.eq.s32.totalorder %s17, 1
      %p54 = por %p52, %p53
      %p56 = scmp.ne.s32.totalorder %s39, %s55
      %p57 = scmp.eq.s32.totalorder %s17, 0
      %p58 = por %p56, %p57
      %s59 = sadd.s32 %s19, 1
      %s60 = sadd.s32 %s26, 1
      %s61 = ssub.s32 %s18, %s30
      %s62 = ssub.s32 %s59, %s60
      %s63 = sor.u32 %s61, %s62
      %p64 = scmp.eq.s32.totalorder %s63, 0
      %s66 = sadd.s32 %s65, 1
      %s67 = scalar_select %p64, %s65, %s66
      %p70 = pneg %p64
      %p71 = scmp.eq.s32.totalorder %s11, 1
      %p72 = por %p70, %p71
      %p73 = scmp.ne.s32.totalorder %s65, %s68
      %p74 = scmp.eq.s32.totalorder %s11, 0
      %p75 = por %p73, %p74
      %p76 = scmp.ne.s32.totalorder %s65, %s68
      %p77 = scmp.eq.s32.totalorder %s16, 1
      %p78 = por %p76, %p77
      %p79 = scmp.ne.s32.totalorder %s68, %s69
      %p80 = scmp.eq.s32.totalorder %s16, 0
      %p81 = por %p79, %p80
      %p82 = scmp.ne.s32.totalorder %s68, %s69
      %p83 = scmp.eq.s32.totalorder %s17, 1
      %p84 = por %p82, %p83
      %p86 = scmp.ne.s32.totalorder %s69, %s85
      %p87 = scmp.eq.s32.totalorder %s17, 0
      %p88 = por %p86, %p87
      %s90 = sadd.s32 %s89, 1
      %p93 = scmp.eq.s32.totalorder %s11, 1
      %p94 = scmp.ne.s32.totalorder %s89, %s91
      %p95 = scmp.eq.s32.totalorder %s11, 0
      %p96 = por %p94, %p95
      %p97 = scmp.ne.s32.totalorder %s89, %s91
      %p98 = scmp.eq.s32.totalorder %s16, 1
      %p99 = por %p97, %p98
      %p100 = scmp.ne.s32.totalorder %s91, %s92
      %p101 = scmp.eq.s32.totalorder %s16, 0
      %p102 = por %p100, %p101
      %p103 = scmp.ne.s32.totalorder %s91, %s92
      %p104 = scmp.eq.s32.totalorder %s17, 1
      %p105 = por %p103, %p104
      %p107 = scmp.ne.s32.totalorder %s92, %s106
      %p108 = scmp.eq.s32.totalorder %s17, 0
      %p109 = por %p107, %p108
      %s111 = sadd.s32 %s110, 1
      %p114 = scmp.eq.s32.totalorder %s11, 1
      %p115 = scmp.ne.s32.totalorder %s110, %s112
      %p116 = scmp.eq.s32.totalorder %s11, 0
      %p117 = por %p115, %p116
      %p118 = scmp.ne.s32.totalorder %s110, %s112
      %p119 = scmp.eq.s32.totalorder %s16, 1
      %p120 = por %p118, %p119
      %p121 = scmp.ne.s32.totalorder %s112, %s113
      %p122 = scmp.eq.s32.totalorder %s16, 0
      %p123 = por %p121, %p122
      %p124 = scmp.ne.s32.totalorder %s112, %s113
      %p125 = scmp.eq.s32.totalorder %s17, 1
      %p126 = por %p124, %p125
      %p128 = scmp.ne.s32.totalorder %s113, %s127
      %p129 = scmp.eq.s32.totalorder %s17, 0
      %p130 = por %p128, %p129
      %s131 = ssub.s32 %s18, %s30
      %s132 = ssub.s32 %s19, %s26
      %s133 = sor.u32 %s131, %s132
      %p134 = scmp.eq.s32.totalorder %s133, 0
      %s136 = sadd.s32 %s135, 1
      %s137 = scalar_select %p134, %s135, %s136
      %p140 = pneg %p134
      %p141 = scmp.eq.s32.totalorder %s11, 1
      %p142 = por %p140, %p141
      %p143 = scmp.ne.s32.totalorder %s135, %s138
      %p144 = scmp.eq.s32.totalorder %s11, 0
      %p145 = por %p143, %p144
      %p146 = scmp.ne.s32.totalorder %s135, %s138
      %p147 = scmp.eq.s32.totalorder %s16, 1
      %p148 = por %p146, %p147
      %p149 = scmp.ne.s32.totalorder %s138, %s139
      %p150 = scmp.eq.s32.totalorder %s16, 0
      %p151 = por %p149, %p150
      %p152 = scmp.ne.s32.totalorder %s138, %s139
      %p153 = scmp.eq.s32.totalorder %s17, 1
      %p154 = por %p152, %p153
      %p156 = scmp.ne.s32.totalorder %s139, %s155
      %p157 = scmp.eq.s32.totalorder %s17, 0
      %p158 = por %p156, %p157
      %p159 = scmp.le.s32.totalorder 1, %s11
      %p160 = scmp.lt.s32.totalorder %s11, 3
      %p161 = pnand %p159, %p160
      %p162 = pneg %p161
      // Predicated region
      $region9: #{forward.1} parent=5 // pred_check
        _
      $region10: #{forward.1} parent=5 // pred_check_branch
        %164 = sbr.rel (%p161) target = $region12
      $region11: #{forward.1} parent=5 // pred_region
        %s165 = ssub.s32 %s11, 1
        // Predicated region
        $region13: #{forward.1} parent=11 // pred_check
          %p166 = pneg %p102
        $region14: #{forward.1} parent=11 // pred_check_branch
          %168 = sbr.rel (%p166) target = $region16
        $region15: #{forward.1} parent=11 // pred_region
          %s170 = ssub.s32 1024, 1024
          %171 = vsyncadd [#allocation3], %s170
          %s172 = sshll.u32 [#allocation2], 4
          %s173 = int_to_ptr.vmem [resolvable:$true] %s172
          %178 = dma.hbm_to_vmem [thread:$0]  %s2, 1024, %s173, [#allocation3], 64, 64, 4
        $region16: #{forward.1} parent=11 // pred_fallthru
          _
        // Predicated region
        $region17: #{forward.1} parent=11 // pred_check
          %p179 = pneg %p123
        $region18: #{forward.1} parent=11 // pred_check_branch
          %181 = sbr.rel (%p179) target = $region20
        $region19: #{forward.1} parent=11 // pred_region
          _
        $region20: #{forward.1} parent=11 // pred_fallthru
          _
      $region12: #{forward.1} parent=5 // pred_fallthru
        _
      %p182 = scmp.lt.s32.totalorder %s11, 2
      // Predicated region
      $region21: #{forward.1} parent=5 // pred_check
        %p183 = pneg %p182
      $region22: #{forward.1} parent=5 // pred_check_branch
        %185 = sbr.rel (%p183) target = $region24
      $region23: #{forward.1} parent=5 // pred_region
        // Predicated region
        $region25: #{forward.1} parent=23 // pred_check
          %p186 = pneg %p45
        $region26: #{forward.1} parent=23 // pred_check_branch
          %188 = sbr.rel (%p186) target = $region28
        $region27: #{forward.1} parent=23 // pred_region
          %p189 = scmp.lt.s32.totalorder %s18, 1
          %s190 = scalar_select %p189, %s18, 1
          %p191 = scmp.lt.s32.totalorder %s19, 1
          %s192 = scalar_select %p191, %s19, 1
          %s193 = smul.addr %s190, 2
          %s194 = sadd.s32 %s192, %s193
          %s195 = smul.addr %s194, 2
          %s196 = scalar_lea.vmem %s0, %s195
        $region28: #{forward.1} parent=23 // pred_fallthru
          _
        // Predicated region
        $region29: #{forward.1} parent=23 // pred_check
          %p197 = pneg %p75
        $region30: #{forward.1} parent=23 // pred_check_branch
          %199 = sbr.rel (%p197) target = $region32
        $region31: #{forward.1} parent=23 // pred_region
          %s200 = sadd.s32 %s19, 1
          %p201 = scmp.lt.s32.totalorder %s18, 1
          %s202 = scalar_select %p201, %s18, 1
          %p203 = scmp.lt.s32.totalorder %s200, 1
          %s204 = scalar_select %p203, %s200, 1
          %s205 = smul.addr %s202, 2
          %s206 = sadd.s32 %s204, %s205
          %s207 = smul.addr %s206, 2
          %s208 = scalar_lea.vmem %s1, %s207
          %s209 = sadd.s32 %s19, 1
        $region32: #{forward.1} parent=23 // pred_fallthru
          _
      $region24: #{forward.1} parent=5 // pred_fallthru
        _
      %p210 = scmp.le.s32.totalorder 1, %s11
      %p211 = scmp.lt.s32.totalorder %s11, 3
      %p212 = pnand %p210, %p211
      %p213 = pneg %p212
      // Predicated region
      $region33: #{forward.1} parent=5 // pred_check
        _
      $region34: #{forward.1} parent=5 // pred_check_branch
        %215 = sbr.rel (%p212) target = $region36
      $region35: #{forward.1} parent=5 // pred_region
        %s216 = ssub.s32 %s11, 1
        // Predicated region
        $region37: #{forward.1} parent=35 // pred_check
          %p217 = pneg %p102
        $region38: #{forward.1} parent=35 // pred_check_branch
          %219 = sbr.rel (%p217) target = $region40
        $region39: #{forward.1} parent=35 // pred_region
          %220 = dma.done [#allocation3], 1024
        $region40: #{forward.1} parent=35 // pred_fallthru
          _
        %p221 = scmp.lt.s32.totalorder %s20, 1
        %s222 = scalar_select %p221, %s20, 1
        %p223 = scmp.lt.s32.totalorder %s21, 1
        %s224 = scalar_select %p223, %s21, 1
        %s225 = smul.addr %s222, 2
        %s226 = sadd.s32 %s224, %s225
        %s227 = smul.addr %s226, 2
        %s228 = scalar_lea.vmem %s0, %s227
        %p229 = pneg %p51
        %p230 = pneg %p48
        %s231 = sadd.s32 %s21, 1
        %p232 = scmp.lt.s32.totalorder %s20, 1
        %s233 = scalar_select %p232, %s20, 1
        %p234 = scmp.lt.s32.totalorder %s231, 1
        %s235 = scalar_select %p234, %s231, 1
        %s236 = smul.addr %s233, 2
        %s237 = sadd.s32 %s235, %s236
        %s238 = smul.addr %s237, 2
        %s239 = scalar_lea.vmem %s1, %s238
        %p240 = pneg %p81
        %p241 = pneg %p78
        %p242 = pneg %p102
        %p243 = pneg %p99
        %p244 = pneg %p123
        %p245 = pneg %p120
        %p246 = pneg %p151
        %p247 = pneg %p148
        %p248 = scmp.lt.s32.totalorder %s20, 1
        %s249 = scalar_select %p248, %s20, 1
        %p250 = scmp.lt.s32.totalorder %s21, 0
        %s251 = scalar_select %p250, %s21, 0
        %s252 = smul.addr %s249, 2
        %s253 = sadd.s32 %s251, %s252
        %s254 = smul.addr %s253, 8
        %s255 = scalar_lea.vmem %s4, %s254
        %p256 = scmp.lt.s32.totalorder %s20, 1
        %s257 = scalar_select %p256, %s20, 1
        %p258 = scmp.lt.s32.totalorder %s21, 1
        %s259 = scalar_select %p258, %s21, 1
        %s260 = smul.addr %s257, 2
        %s261 = sadd.s32 %s259, %s260
        %s262 = smul.addr %s261, 2
        %s263 = scalar_lea.vmem %s0, %s262
        %s264 = sadd.s32 %s21, 1
        %p265 = scmp.lt.s32.totalorder %s20, 1
        %s266 = scalar_select %p265, %s20, 1
        %p267 = scmp.lt.s32.totalorder %s264, 1
        %s268 = scalar_select %p267, %s264, 1
        %s269 = smul.addr %s266, 2
        %s270 = sadd.s32 %s268, %s269
        %s271 = smul.addr %s270, 2
        %s272 = scalar_lea.vmem %s1, %s271
        %s273 = sadd.s32 %s21, 1
        %p274 = scmp.lt.s32.totalorder %s20, 1
        %s275 = scalar_select %p274, %s20, 1
        %p276 = scmp.lt.s32.totalorder %s21, 0
        %s277 = scalar_select %p276, %s21, 0
        %s278 = smul.addr %s275, 2
        %s279 = sadd.s32 %s277, %s278
        %s280 = smul.addr %s279, 8
        %s281 = scalar_lea.vmem %s4, %s280
        %v283 = vld [vmem:[%s263] sm:$0x3]
        %v284 = vld [vmem:[%s272] sm:$0x3]
        %v285 = vld [vmem:[#allocation2] sm:$0xf]
        %v286 = vld [vmem:[#allocation2 + $0x4] sm:$0xf]
        %s287 = scalar_lea.vmem [#allocation2], 8
        %v288 = vld [vmem:[%s287] sm:$0xf]
        %v289 = vld [vmem:[%s287 + $0x4] sm:$0xf]
        %v292 = vunpack.c.l.b16 %v288
        %v293 = vunpack.c.l.b16 %v289
        %v294 = vpack.c.b16 %v293, %v292
        %297 = vrot.lane.b32.xlu0 %v283, 127
        %v298 = vpop.permute.xlu0 %297
        %299 = vrot.lane.b32.xlu0 %v284, 127
        %v300 = vpop.permute.xlu0 %299
        %vm301 = vcmask 1039360
        %v302 = vsel %vm301, %v298, %v300
        %vm303 = vcmask 31744
        %v305 = vsel %vm303, %v294, 0
        %vm307 = vcmask 1041408
        %v309 = vsel %vm307, %v302, 0
        %311 = vmatprep.subr.bf16.mxu0 0
        %312 = vmatpush1.bf16.msra.mxu0 %v309
        %313 = vmatprep.subr.bf16.mxu0 0
        %314 = vmatpush1.bf16.msra.mxu0 0
        %315 = vmatprep.subr.bf16.mxu0 0
        %316 = vmatpush1.bf16.msra.mxu0 0
        %317 = vmatprep.subr.bf16.mxu0 0
        %318 = vmatpush1.bf16.msra.mxu0 0
        %319 = vmatprep.subr.bf16.mxu0 0
        %320 = vmatpush1.bf16.msra.mxu0 0
        %321 = vmatprep.subr.bf16.mxu0 0
        %322 = vmatpush1.bf16.msra.mxu0 0
        %323 = vmatprep.subr.bf16.mxu0 0
        %324 = vmatpush1.bf16.msra.mxu0 0
        %325 = vmatprep.subr.bf16.mxu0 0
        %326 = vmatpush1.bf16.msra.mxu0 0
        %327 = vmatprep.subr.bf16.mxu0 0
        %328 = vmatpush1.bf16.msra.mxu0 0
        %329 = vmatprep.subr.bf16.mxu0 0
        %330 = vmatpush1.bf16.msra.mxu0 0
        %331 = vmatprep.subr.bf16.mxu0 0
        %332 = vmatpush1.bf16.msra.mxu0 0
        %333 = vmatprep.subr.bf16.mxu0 0
        %334 = vmatpush1.bf16.msra.mxu0 0
        %335 = vmatprep.subr.bf16.mxu0 0
        %336 = vmatpush1.bf16.msra.mxu0 0
        %337 = vmatprep.subr.bf16.mxu0 0
        %338 = vmatpush1.bf16.msra.mxu0 0
        %339 = vmatprep.subr.bf16.mxu0 0
        %340 = vmatpush1.bf16.msra.mxu0 0
        %341 = vmatprep.subr.bf16.mxu0 0
        %342 = vmatpush1.bf16.msra.mxu0 0
        %343 = vmatprep.mubr.bf16.mxu0 0
        %344 = vmatmul.mubr.bf16.gmra.mrb[0].mxu0 %v305
        %v345 = vpop.f32.mrb[0].mxu0
        %v346 = vadd.f32 0.0, %v345
        %v347 = vpop.f32.mrb[0].mxu0
        %v348 = vpop.f32.mrb[0].mxu0
        %v349 = vadd.f32 0.0, %v348
        %v350 = vpop.f32.mrb[0].mxu0
        %351 = vdwg.mxu0
        %v354 = vunpack.c.l.b16 %v285
        %v355 = vunpack.c.l.b16 %v286
        %v356 = vpack.c.b16 %v355, %v354
        %v358 = vsel %vm303, %v356, 0
        %v361 = vsel %vm307, %v283, 0
        %363 = vmatprep.subr.bf16.mxu0 0
        %364 = vmatpush1.bf16.msra.mxu0 %v361
        %365 = vmatprep.subr.bf16.mxu0 0
        %366 = vmatpush1.bf16.msra.mxu0 0
        %367 = vmatprep.subr.bf16.mxu0 0
        %368 = vmatpush1.bf16.msra.mxu0 0
        %369 = vmatprep.subr.bf16.mxu0 0
        %370 = vmatpush1.bf16.msra.mxu0 0
        %371 = vmatprep.subr.bf16.mxu0 0
        %372 = vmatpush1.bf16.msra.mxu0 0
        %373 = vmatprep.subr.bf16.mxu0 0
        %374 = vmatpush1.bf16.msra.mxu0 0
        %375 = vmatprep.subr.bf16.mxu0 0
        %376 = vmatpush1.bf16.msra.mxu0 0
        %377 = vmatprep.subr.bf16.mxu0 0
        %378 = vmatpush1.bf16.msra.mxu0 0
        %379 = vmatprep.subr.bf16.mxu0 0
        %380 = vmatpush1.bf16.msra.mxu0 0
        %381 = vmatprep.subr.bf16.mxu0 0
        %382 = vmatpush1.bf16.msra.mxu0 0
        %383 = vmatprep.subr.bf16.mxu0 0
        %384 = vmatpush1.bf16.msra.mxu0 0
        %385 = vmatprep.subr.bf16.mxu0 0
        %386 = vmatpush1.bf16.msra.mxu0 0
        %387 = vmatprep.subr.bf16.mxu0 0
        %388 = vmatpush1.bf16.msra.mxu0 0
        %389 = vmatprep.subr.bf16.mxu0 0
        %390 = vmatpush1.bf16.msra.mxu0 0
        %391 = vmatprep.subr.bf16.mxu0 0
        %392 = vmatpush1.bf16.msra.mxu0 0
        %393 = vmatprep.subr.bf16.mxu0 0
        %394 = vmatpush1.bf16.msra.mxu0 0
        %395 = vmatprep.mubr.bf16.mxu0 0
        %396 = vmatmul.mubr.bf16.gmra.mrb[0].mxu0 %v358
        %v397 = vpop.f32.mrb[0].mxu0
        %v398 = vadd.f32 %v346, %v397
        %v399 = vpop.f32.mrb[0].mxu0
        %v400 = vpop.f32.mrb[0].mxu0
        %v401 = vadd.f32 %v349, %v400
        %v402 = vpop.f32.mrb[0].mxu0
        %403 = vdwg.mxu0
        %s404 = scalar_lea.vmem [#allocation2], 16
        %v405 = vld [vmem:[%s404] sm:$0xf]
        %v406 = vld [vmem:[%s404 + $0x4] sm:$0xf]
        %v409 = vunpack.c.l.b16 %v405
        %v410 = vunpack.c.l.b16 %v406
        %v411 = vpack.c.b16 %v410, %v409
        %412 = vrot.lane.b32.xlu0 %v283, 126
        %v413 = vpop.permute.xlu0 %412
        %414 = vrot.lane.b32.xlu0 %v284, 126
        %v415 = vpop.permute.xlu0 %414
        %vm416 = vcmask 1031168
        %v417 = vsel %vm416, %v413, %v415
        %v419 = vsel %vm303, %v411, 0
        %v422 = vsel %vm307, %v417, 0
        %424 = vmatprep.subr.bf16.mxu0 0
        %425 = vmatpush1.bf16.msra.mxu0 %v422
        %426 = vmatprep.subr.bf16.mxu0 0
        %427 = vmatpush1.bf16.msra.mxu0 0
        %428 = vmatprep.subr.bf16.mxu0 0
        %429 = vmatpush1.bf16.msra.mxu0 0
        %430 = vmatprep.subr.bf16.mxu0 0
        %431 = vmatpush1.bf16.msra.mxu0 0
        %432 = vmatprep.subr.bf16.mxu0 0
        %433 = vmatpush1.bf16.msra.mxu0 0
        %434 = vmatprep.subr.bf16.mxu0 0
        %435 = vmatpush1.bf16.msra.mxu0 0
        %436 = vmatprep.subr.bf16.mxu0 0
        %437 = vmatpush1.bf16.msra.mxu0 0
        %438 = vmatprep.subr.bf16.mxu0 0
        %439 = vmatpush1.bf16.msra.mxu0 0
        %440 = vmatprep.subr.bf16.mxu0 0
        %441 = vmatpush1.bf16.msra.mxu0 0
        %442 = vmatprep.subr.bf16.mxu0 0
        %443 = vmatpush1.bf16.msra.mxu0 0
        %444 = vmatprep.subr.bf16.mxu0 0
        %445 = vmatpush1.bf16.msra.mxu0 0
        %446 = vmatprep.subr.bf16.mxu0 0
        %447 = vmatpush1.bf16.msra.mxu0 0
        %448 = vmatprep.subr.bf16.mxu0 0
        %449 = vmatpush1.bf16.msra.mxu0 0
        %450 = vmatprep.subr.bf16.mxu0 0
        %451 = vmatpush1.bf16.msra.mxu0 0
        %452 = vmatprep.subr.bf16.mxu0 0
        %453 = vmatpush1.bf16.msra.mxu0 0
        %454 = vmatprep.subr.bf16.mxu0 0
        %455 = vmatpush1.bf16.msra.mxu0 0
        %456 = vmatprep.mubr.bf16.mxu0 0
        %457 = vmatmul.mubr.bf16.gmra.mrb[0].mxu0 %v419
        %v458 = vpop.f32.mrb[0].mxu0
        %v459 = vadd.f32 0.0, %v458
        %v460 = vpop.f32.mrb[0].mxu0
        %v461 = vpop.f32.mrb[0].mxu0
        %v462 = vadd.f32 0.0, %v461
        %v463 = vpop.f32.mrb[0].mxu0
        %464 = vdwg.mxu0
        %v465 = vadd.f32 %v398, %v459
        %v466 = vadd.f32 %v401, %v462
        %s467 = scalar_lea.vmem [#allocation2], 24
        %v468 = vld [vmem:[%s467] sm:$0xf]
        %v469 = vld [vmem:[%s467 + $0x4] sm:$0xf]
        %v472 = vunpack.c.l.b16 %v468
        %v473 = vunpack.c.l.b16 %v469
        %v474 = vpack.c.b16 %v473, %v472
        %475 = vrot.lane.b32.xlu0 %v283, 125
        %v476 = vpop.permute.xlu0 %475
        %477 = vrot.lane.b32.xlu0 %v284, 125
        %v478 = vpop.permute.xlu0 %477
        %vm479 = vcmask 1022976
        %v480 = vsel %vm479, %v476, %v478
        %v482 = vsel %vm303, %v474, 0
        %v485 = vsel %vm307, %v480, 0
        %487 = vmatprep.subr.bf16.mxu0 0
        %488 = vmatpush1.bf16.msra.mxu0 %v485
        %489 = vmatprep.subr.bf16.mxu0 0
        %490 = vmatpush1.bf16.msra.mxu0 0
        %491 = vmatprep.subr.bf16.mxu0 0
        %492 = vmatpush1.bf16.msra.mxu0 0
        %493 = vmatprep.subr.bf16.mxu0 0
        %494 = vmatpush1.bf16.msra.mxu0 0
        %495 = vmatprep.subr.bf16.mxu0 0
        %496 = vmatpush1.bf16.msra.mxu0 0
        %497 = vmatprep.subr.bf16.mxu0 0
        %498 = vmatpush1.bf16.msra.mxu0 0
        %499 = vmatprep.subr.bf16.mxu0 0
        %500 = vmatpush1.bf16.msra.mxu0 0
        %501 = vmatprep.subr.bf16.mxu0 0
        %502 = vmatpush1.bf16.msra.mxu0 0
        %503 = vmatprep.subr.bf16.mxu0 0
        %504 = vmatpush1.bf16.msra.mxu0 0
        %505 = vmatprep.subr.bf16.mxu0 0
        %506 = vmatpush1.bf16.msra.mxu0 0
        %507 = vmatprep.subr.bf16.mxu0 0
        %508 = vmatpush1.bf16.msra.mxu0 0
        %509 = vmatprep.subr.bf16.mxu0 0
        %510 = vmatpush1.bf16.msra.mxu0 0
        %511 = vmatprep.subr.bf16.mxu0 0
        %512 = vmatpush1.bf16.msra.mxu0 0
        %513 = vmatprep.subr.bf16.mxu0 0
        %514 = vmatpush1.bf16.msra.mxu0 0
        %515 = vmatprep.subr.bf16.mxu0 0
        %516 = vmatpush1.bf16.msra.mxu0 0
        %517 = vmatprep.subr.bf16.mxu0 0
        %518 = vmatpush1.bf16.msra.mxu0 0
        %519 = vmatprep.mubr.bf16.mxu0 0
        %520 = vmatmul.mubr.bf16.gmra.mrb[0].mxu0 %v482
        %v521 = vpop.f32.mrb[0].mxu0
        %v522 = vadd.f32 0.0, %v521
        %v523 = vpop.f32.mrb[0].mxu0
        %v524 = vpop.f32.mrb[0].mxu0
        %v525 = vadd.f32 0.0, %v524
        %v526 = vpop.f32.mrb[0].mxu0
        %527 = vdwg.mxu0
        %v528 = vadd.f32 %v465, %v522
        %v529 = vadd.f32 %v466, %v525
        %s530 = scalar_lea.vmem [#allocation2], 32
        %v531 = vld [vmem:[%s530] sm:$0xf]
        %v532 = vld [vmem:[%s530 + $0x4] sm:$0xf]
        %v535 = vunpack.c.l.b16 %v531
        %v536 = vunpack.c.l.b16 %v532
        %v537 = vpack.c.b16 %v536, %v535
        %538 = vrot.lane.b32.xlu0 %v283, 124
        %v539 = vpop.permute.xlu0 %538
        %540 = vrot.lane.b32.xlu0 %v284, 124
        %v541 = vpop.permute.xlu0 %540
        %vm542 = vcmask 1014784
        %v543 = vsel %vm542, %v539, %v541
        %v545 = vsel %vm303, %v537, 0
        %v548 = vsel %vm307, %v543, 0
        %550 = vmatprep.subr.bf16.mxu0 0
        %551 = vmatpush1.bf16.msra.mxu0 %v548
        %552 = vmatprep.subr.bf16.mxu0 0
        %553 = vmatpush1.bf16.msra.mxu0 0
        %554 = vmatprep.subr.bf16.mxu0 0
        %555 = vmatpush1.bf16.msra.mxu0 0
        %556 = vmatprep.subr.bf16.mxu0 0
        %557 = vmatpush1.bf16.msra.mxu0 0
        %558 = vmatprep.subr.bf16.mxu0 0
        %559 = vmatpush1.bf16.msra.mxu0 0
        %560 = vmatprep.subr.bf16.mxu0 0
        %561 = vmatpush1.bf16.msra.mxu0 0
        %562 = vmatprep.subr.bf16.mxu0 0
        %563 = vmatpush1.bf16.msra.mxu0 0
        %564 = vmatprep.subr.bf16.mxu0 0
        %565 = vmatpush1.bf16.msra.mxu0 0
        %566 = vmatprep.subr.bf16.mxu0 0
        %567 = vmatpush1.bf16.msra.mxu0 0
        %568 = vmatprep.subr.bf16.mxu0 0
        %569 = vmatpush1.bf16.msra.mxu0 0
        %570 = vmatprep.subr.bf16.mxu0 0
        %571 = vmatpush1.bf16.msra.mxu0 0
        %572 = vmatprep.subr.bf16.mxu0 0
        %573 = vmatpush1.bf16.msra.mxu0 0
        %574 = vmatprep.subr.bf16.mxu0 0
        %575 = vmatpush1.bf16.msra.mxu0 0
        %576 = vmatprep.subr.bf16.mxu0 0
        %577 = vmatpush1.bf16.msra.mxu0 0
        %578 = vmatprep.subr.bf16.mxu0 0
        %579 = vmatpush1.bf16.msra.mxu0 0
        %580 = vmatprep.subr.bf16.mxu0 0
        %581 = vmatpush1.bf16.msra.mxu0 0
        %582 = vmatprep.mubr.bf16.mxu0 0
        %583 = vmatmul.mubr.bf16.gmra.mrb[0].mxu0 %v545
        %v584 = vpop.f32.mrb[0].mxu0
        %v585 = vadd.f32 0.0, %v584
        %v586 = vpop.f32.mrb[0].mxu0
        %v587 = vpop.f32.mrb[0].mxu0
        %v588 = vadd.f32 0.0, %v587
        %v589 = vpop.f32.mrb[0].mxu0
        %590 = vdwg.mxu0
        %v591 = vadd.f32 %v528, %v585
        %v592 = vadd.f32 %v529, %v588
        %s593 = scalar_lea.vmem [#allocation2], 40
        %v594 = vld [vmem:[%s593] sm:$0xf]
        %v595 = vld [vmem:[%s593 + $0x4] sm:$0xf]
        %v598 = vunpack.c.l.b16 %v594
        %v599 = vunpack.c.l.b16 %v595
        %v600 = vpack.c.b16 %v599, %v598
        %601 = vrot.lane.b32.xlu0 %v283, 123
        %v602 = vpop.permute.xlu0 %601
        %603 = vrot.lane.b32.xlu0 %v284, 123
        %v604 = vpop.permute.xlu0 %603
        %vm605 = vcmask 1006592
        %v606 = vsel %vm605, %v602, %v604
        %v608 = vsel %vm303, %v600, 0
        %v611 = vsel %vm307, %v606, 0
        %613 = vmatprep.subr.bf16.mxu0 0
        %614 = vmatpush1.bf16.msra.mxu0 %v611
        %615 = vmatprep.subr.bf16.mxu0 0
        %616 = vmatpush1.bf16.msra.mxu0 0
        %617 = vmatprep.subr.bf16.mxu0 0
        %618 = vmatpush1.bf16.msra.mxu0 0
        %619 = vmatprep.subr.bf16.mxu0 0
        %620 = vmatpush1.bf16.msra.mxu0 0
        %621 = vmatprep.subr.bf16.mxu0 0
        %622 = vmatpush1.bf16.msra.mxu0 0
        %623 = vmatprep.subr.bf16.mxu0 0
        %624 = vmatpush1.bf16.msra.mxu0 0
        %625 = vmatprep.subr.bf16.mxu0 0
        %626 = vmatpush1.bf16.msra.mxu0 0
        %627 = vmatprep.subr.bf16.mxu0 0
        %628 = vmatpush1.bf16.msra.mxu0 0
        %629 = vmatprep.subr.bf16.mxu0 0
        %630 = vmatpush1.bf16.msra.mxu0 0
        %631 = vmatprep.subr.bf16.mxu0 0
        %632 = vmatpush1.bf16.msra.mxu0 0
        %633 = vmatprep.subr.bf16.mxu0 0
        %634 = vmatpush1.bf16.msra.mxu0 0
        %635 = vmatprep.subr.bf16.mxu0 0
        %636 = vmatpush1.bf16.msra.mxu0 0
        %637 = vmatprep.subr.bf16.mxu0 0
        %638 = vmatpush1.bf16.msra.mxu0 0
        %639 = vmatprep.subr.bf16.mxu0 0
        %640 = vmatpush1.bf16.msra.mxu0 0
        %641 = vmatprep.subr.bf16.mxu0 0
        %642 = vmatpush1.bf16.msra.mxu0 0
        %643 = vmatprep.subr.bf16.mxu0 0
        %644 = vmatpush1.bf16.msra.mxu0 0
        %645 = vmatprep.mubr.bf16.mxu0 0
        %646 = vmatmul.mubr.bf16.gmra.mrb[0].mxu0 %v608
        %v647 = vpop.f32.mrb[0].mxu0
        %v648 = vadd.f32 0.0, %v647
        %v649 = vpop.f32.mrb[0].mxu0
        %v650 = vpop.f32.mrb[0].mxu0
        %v651 = vadd.f32 0.0, %v650
        %v652 = vpop.f32.mrb[0].mxu0
        %653 = vdwg.mxu0
        %v654 = vadd.f32 %v591, %v648
        %v655 = vadd.f32 %v592, %v651
        %s656 = scalar_lea.vmem [#allocation2], 48
        %v657 = vld [vmem:[%s656] sm:$0xf]
        %v658 = vld [vmem:[%s656 + $0x4] sm:$0xf]
        %v661 = vunpack.c.l.b16 %v657
        %v662 = vunpack.c.l.b16 %v658
        %v663 = vpack.c.b16 %v662, %v661
        %664 = vrot.lane.b32.xlu0 %v283, 122
        %v665 = vpop.permute.xlu0 %664
        %666 = vrot.lane.b32.xlu0 %v284, 122
        %v667 = vpop.permute.xlu0 %666
        %vm668 = vcmask 998400
        %v669 = vsel %vm668, %v665, %v667
        %v671 = vsel %vm303, %v663, 0
        %v674 = vsel %vm307, %v669, 0
        %676 = vmatprep.subr.bf16.mxu0 0
        %677 = vmatpush1.bf16.msra.mxu0 %v674
        %678 = vmatprep.subr.bf16.mxu0 0
        %679 = vmatpush1.bf16.msra.mxu0 0
        %680 = vmatprep.subr.bf16.mxu0 0
        %681 = vmatpush1.bf16.msra.mxu0 0
        %682 = vmatprep.subr.bf16.mxu0 0
        %683 = vmatpush1.bf16.msra.mxu0 0
        %684 = vmatprep.subr.bf16.mxu0 0
        %685 = vmatpush1.bf16.msra.mxu0 0
        %686 = vmatprep.subr.bf16.mxu0 0
        %687 = vmatpush1.bf16.msra.mxu0 0
        %688 = vmatprep.subr.bf16.mxu0 0
        %689 = vmatpush1.bf16.msra.mxu0 0
        %690 = vmatprep.subr.bf16.mxu0 0
        %691 = vmatpush1.bf16.msra.mxu0 0
        %692 = vmatprep.subr.bf16.mxu0 0
        %693 = vmatpush1.bf16.msra.mxu0 0
        %694 = vmatprep.subr.bf16.mxu0 0
        %695 = vmatpush1.bf16.msra.mxu0 0
        %696 = vmatprep.subr.bf16.mxu0 0
        %697 = vmatpush1.bf16.msra.mxu0 0
        %698 = vmatprep.subr.bf16.mxu0 0
        %699 = vmatpush1.bf16.msra.mxu0 0
        %700 = vmatprep.subr.bf16.mxu0 0
        %701 = vmatpush1.bf16.msra.mxu0 0
        %702 = vmatprep.subr.bf16.mxu0 0
        %703 = vmatpush1.bf16.msra.mxu0 0
        %704 = vmatprep.subr.bf16.mxu0 0
        %705 = vmatpush1.bf16.msra.mxu0 0
        %706 = vmatprep.subr.bf16.mxu0 0
        %707 = vmatpush1.bf16.msra.mxu0 0
        %708 = vmatprep.mubr.bf16.mxu0 0
        %709 = vmatmul.mubr.bf16.gmra.mrb[0].mxu0 %v671
        %v710 = vpop.f32.mrb[0].mxu0
        %v711 = vadd.f32 0.0, %v710
        %v712 = vpop.f32.mrb[0].mxu0
        %v713 = vpop.f32.mrb[0].mxu0
        %v714 = vadd.f32 0.0, %v713
        %v715 = vpop.f32.mrb[0].mxu0
        %716 = vdwg.mxu0
        %v717 = vadd.f32 %v654, %v711
        %v718 = vadd.f32 %v655, %v714
        %s719 = scalar_lea.vmem [#allocation2], 56
        %v720 = vld [vmem:[%s719] sm:$0xf]
        %v721 = vld [vmem:[%s719 + $0x4] sm:$0xf]
        %v724 = vunpack.c.l.b16 %v720
        %v725 = vunpack.c.l.b16 %v721
        %v726 = vpack.c.b16 %v725, %v724
        %727 = vrot.lane.b32.xlu0 %v283, 121
        %v728 = vpop.permute.xlu0 %727
        %729 = vrot.lane.b32.xlu0 %v284, 121
        %v730 = vpop.permute.xlu0 %729
        %vm731 = vcmask 990208
        %v732 = vsel %vm731, %v728, %v730
        %v734 = vsel %vm303, %v726, 0
        %v737 = vsel %vm307, %v732, 0
        %739 = vmatprep.subr.bf16.mxu0 0
        %740 = vmatpush1.bf16.msra.mxu0 %v737
        %741 = vmatprep.subr.bf16.mxu0 0
        %742 = vmatpush1.bf16.msra.mxu0 0
        %743 = vmatprep.subr.bf16.mxu0 0
        %744 = vmatpush1.bf16.msra.mxu0 0
        %745 = vmatprep.subr.bf16.mxu0 0
        %746 = vmatpush1.bf16.msra.mxu0 0
        %747 = vmatprep.subr.bf16.mxu0 0
        %748 = vmatpush1.bf16.msra.mxu0 0
        %749 = vmatprep.subr.bf16.mxu0 0
        %750 = vmatpush1.bf16.msra.mxu0 0
        %751 = vmatprep.subr.bf16.mxu0 0
        %752 = vmatpush1.bf16.msra.mxu0 0
        %753 = vmatprep.subr.bf16.mxu0 0
        %754 = vmatpush1.bf16.msra.mxu0 0
        %755 = vmatprep.subr.bf16.mxu0 0
        %756 = vmatpush1.bf16.msra.mxu0 0
        %757 = vmatprep.subr.bf16.mxu0 0
        %758 = vmatpush1.bf16.msra.mxu0 0
        %759 = vmatprep.subr.bf16.mxu0 0
        %760 = vmatpush1.bf16.msra.mxu0 0
        %761 = vmatprep.subr.bf16.mxu0 0
        %762 = vmatpush1.bf16.msra.mxu0 0
        %763 = vmatprep.subr.bf16.mxu0 0
        %764 = vmatpush1.bf16.msra.mxu0 0
        %765 = vmatprep.subr.bf16.mxu0 0
        %766 = vmatpush1.bf16.msra.mxu0 0
        %767 = vmatprep.subr.bf16.mxu0 0
        %768 = vmatpush1.bf16.msra.mxu0 0
        %769 = vmatprep.subr.bf16.mxu0 0
        %770 = vmatpush1.bf16.msra.mxu0 0
        %771 = vmatprep.mubr.bf16.mxu0 0
        %772 = vmatmul.mubr.bf16.gmra.mrb[0].mxu0 %v734
        %v773 = vpop.f32.mrb[0].mxu0
        %v774 = vadd.f32 0.0, %v773
        %v775 = vpop.f32.mrb[0].mxu0
        %v776 = vpop.f32.mrb[0].mxu0
        %v777 = vadd.f32 0.0, %v776
        %v778 = vpop.f32.mrb[0].mxu0
        %779 = vdwg.mxu0
        %v780 = vadd.f32 %v717, %v774
        %v781 = vadd.f32 %v718, %v777
        %v782 = vld [vmem:[%s3] sm:$0xff]
        %v783 = vld [vmem:[%s3 + $0x8] sm:$0xf]
        %785 = vset.pattern.permute.xlu0 0
        %786 = vperm.xlu0 %785, %v782
        %v787 = vpop.permute.xlu0 %786
        %790 = vset.pattern.permute.xlu0 0
        %791 = vperm.xlu0 %790, %v783
        %v792 = vpop.permute.xlu0 %791
        %v794 = vadd.f32 %v780, %v787
        %v795 = vadd.f32 %v781, %v792
        %796 = vst [vmem:[%s281] sm:$0xff] %v794
        %797 = vst [vmem:[%s281 + $0x8] sm:$0xf] %v795
        %p798 = scmp.lt.s32.totalorder %s20, 1
        %s799 = scalar_select %p798, %s20, 1
        %p800 = scmp.lt.s32.totalorder %s21, 0
        %s801 = scalar_select %p800, %s21, 0
        %s802 = smul.addr %s799, 2
        %s803 = sadd.s32 %s801, %s802
        %s804 = smul.addr %s803, 8
        %s805 = scalar_lea.vmem %s4, %s804
        // Predicated region
        $region41: #{forward.1} parent=35 // pred_check
          %p806 = pneg %p148
        $region42: #{forward.1} parent=35 // pred_check_branch
          %808 = sbr.rel (%p806) target = $region44
        $region43: #{forward.1} parent=35 // pred_region
          _
        $region44: #{forward.1} parent=35 // pred_fallthru
          _
      $region36: #{forward.1} parent=5 // pred_fallthru
        _
      %p809 = scmp.le.s32.totalorder 2, %s11
      // Predicated region
      $region45: #{forward.1} parent=5 // pred_check
        %p810 = pneg %p809
      $region46: #{forward.1} parent=5 // pred_check_branch
        %812 = sbr.rel (%p810) target = $region48
      $region47: #{forward.1} parent=5 // pred_region
        %s813 = ssub.s32 %s11, 2
        // Predicated region
        $region49: #{forward.1} parent=47 // pred_check
          %p814 = pneg %p154
        $region50: #{forward.1} parent=47 // pred_check_branch
          %816 = sbr.rel (%p814) target = $region52
        $region51: #{forward.1} parent=47 // pred_region
          %p817 = scmp.lt.s32.totalorder %s22, 1
          %s818 = scalar_select %p817, %s22, 1
          %p819 = scmp.lt.s32.totalorder %s23, 0
          %s820 = scalar_select %p819, %s23, 0
          %s821 = smul.addr %s818, 2
          %s822 = sadd.s32 %s820, %s821
          %s823 = smul.addr %s822, 8
          %s824 = scalar_lea.vmem %s4, %s823
        $region52: #{forward.1} parent=47 // pred_fallthru
          _
      $region48: #{forward.1} parent=5 // pred_fallthru
        _
    $region6: #{forward.1} parent=1 // loop_footer
      %s15 = sadd.s32 1, %s11
    $region7: #{forward.1} parent=1 // loop_footer_branch
      %10 = sbr.rel target = $region3
    $region8: #{forward.1} parent=1 // loop_exit
      _
    %825 = vsyncpa [#allocation3], 1
    %s826 = scalar_lea.sflag [#allocation3], 1
    %827 = vsyncpa %s826, 1

</llo_original>
